<compile_context>
chip_gen: v7x
topology: tpu7x:2x2x1
jax: 0.10.0
libtpu: 0.0.40
codegen_flags: <defaults>
</compile_context>

<pallas_src>
import functools

import jax
import jax.numpy as jnp
from jax.experimental import pallas as pl
from jax.experimental.pallas import tpu as pltpu

HIDDEN_TRUE = 124   # module's hidden width
HIDDEN = 128        # padded, lane-aligned hidden width used inside the kernel
SECT = 16           # blob section alignment (rows); aligned for f32 and bf16


def _round_up(n, m):
    return ((n + m - 1) // m) * m


def _make_mlp_kernel(input_dim, in_sect, hidden, out_pad):
    """Fused 3-layer MLP kernel with static, aligned slice offsets into the
    packed parameter blob (section starts are multiples of 16 rows)."""
    r_w1 = 0
    r_b1 = r_w1 + in_sect
    r_w2 = r_b1 + SECT
    r_b2 = r_w2 + hidden
    r_w3 = r_b2 + SECT
    r_b3 = r_w3 + hidden

    def kernel(x_ref, p_ref, o_ref):
        f32 = jnp.float32
        cdt = p_ref.dtype                                   # matmul operand dtype

        x = x_ref[...].astype(cdt)                          # (TM, input_dim)
        w1 = p_ref[r_w1:r_w1 + input_dim, 0:hidden]         # (input_dim, 128)
        b1 = p_ref[r_b1:r_b1 + 1, 0:hidden].astype(f32)     # (1, 128)
        w2 = p_ref[r_w2:r_w2 + hidden, 0:hidden]            # (128, 128)
        b2 = p_ref[r_b2:r_b2 + 1, 0:hidden].astype(f32)     # (1, 128)
        w3 = p_ref[r_w3:r_w3 + hidden, 0:out_pad]           # (128, out_pad)
        b3 = p_ref[r_b3:r_b3 + 1, 0:out_pad].astype(f32)    # (1, out_pad)

        # Layer 1: Linear + ReLU (MXU matmul, f32 accumulation, K=input_dim)
        h1 = jnp.dot(x, w1, preferred_element_type=f32) + b1
        h1 = jnp.maximum(h1, 0.0).astype(cdt)
        # Layer 2: Linear + ReLU
        h2 = jnp.dot(h1, w2, preferred_element_type=f32) + b2
        h2 = jnp.maximum(h2, 0.0).astype(cdt)
        # Layer 3: narrow head (N = out_pad), no activation
        out = jnp.dot(h2, w3, preferred_element_type=f32) + b3
        o_ref[...] = out.astype(o_ref.dtype)

    return kernel


def init_params(key, input_dim, output_dim, max_degree, hidden=HIDDEN_TRUE):
    """Deterministic init mimicking PyTorch nn.Linear defaults
    (uniform(-1/sqrt(fan_in), 1/sqrt(fan_in)) for weight and bias).
    Weights are stored pre-transposed as (in_features, out_features) so
    y = x @ W + b matches PyTorch's y = x @ W_pt.T + b exactly."""
    dims = [(input_dim, hidden), (hidden, hidden), (hidden, max_degree * output_dim)]
    params = {}
    keys = jax.random.split(key, 2 * len(dims))
    for i, (fan_in, fan_out) in enumerate(dims):
        bound = 1.0 / (fan_in ** 0.5)
        w = jax.random.uniform(keys[2 * i], (fan_in, fan_out),
                               minval=-bound, maxval=bound, dtype=jnp.float32)
        b = jax.random.uniform(keys[2 * i + 1], (1, fan_out),
                               minval=-bound, maxval=bound, dtype=jnp.float32)
        params[f"w{i + 1}"] = w
        params[f"b{i + 1}"] = b
    return params


def pack_params(params, input_dim, out_dim, param_dtype=jnp.float32):
    """Zero-pad to aligned shapes and pack all 6 parameter tensors into a
    single (R, cols) blob (one DMA for all weights). Padded hidden columns /
    rows carry exact zeros, so ReLU(0)=0 propagates and results are identical
    to the unpadded math. Call once; the blob is reused by every forward."""
    in_sect = _round_up(max(input_dim, 1), SECT)
    out_pad = _round_up(max(out_dim, 1), 8)
    cols = max(HIDDEN, out_pad)

    def pad2(a, rows):
        a = jnp.asarray(a, jnp.float32)
        if a.ndim == 1:
            a = a.reshape(1, -1)
        buf = jnp.zeros((rows, cols), jnp.float32)
        return buf.at[:a.shape[0], :a.shape[1]].set(a)

    blob = jnp.concatenate([
        pad2(params["w1"], in_sect),
        pad2(params["b1"], SECT),
        pad2(params["w2"], HIDDEN),
        pad2(params["b2"], SECT),
        pad2(params["w3"], HIDDEN),
        pad2(params["b3"], SECT),
    ], axis=0).astype(param_dtype)

    meta = dict(input_dim=input_dim, in_sect=in_sect,
                out_pad=out_pad, out_dim=out_dim)
    return blob, meta


@functools.partial(jax.jit, static_argnames=("input_dim", "in_sect", "out_pad",
                                             "out_dim", "tm"))
def _forward_impl(x, blob, *, input_dim, in_sect, out_pad, out_dim, tm):
    batch = x.shape[0]
    batch8 = _round_up(max(batch, 1), 8)

    # Clamp tm to a multiple of 8 (sublane rule) and to the padded batch.
    tm = _round_up(min(max(tm, 8), batch8), 8)
    # v7x: keep >= 2 grid steps for moderate batches so both TensorCores get
    # work under dimension_semantics=("parallel",); no-op on v5e/v6e.
    min_tiles = 2 if batch8 >= 256 else 1
    n_tiles = max(min_tiles, pl.cdiv(batch8, tm))
    tm_eff = _round_up(pl.cdiv(batch8, n_tiles), 8)
    batch_pad = tm_eff * n_tiles

    # Only row padding (no lane padding of x); skipped when already aligned.
    x_in = x if batch_pad == batch else jnp.pad(x, ((0, batch_pad - batch), (0, 0)))

    kernel = _make_mlp_kernel(input_dim, in_sect, HIDDEN, out_pad)

    flops = 2 * batch_pad * (input_dim * HIDDEN + HIDDEN * HIDDEN + HIDDEN * out_pad)
    bytes_accessed = (x_in.size * x_in.dtype.itemsize
                      + blob.size * blob.dtype.itemsize
                      + batch_pad * out_pad * 4)

    out = pl.pallas_call(
        kernel,
        out_shape=jax.ShapeDtypeStruct((batch_pad, out_pad), jnp.float32),
        grid_spec=pltpu.PrefetchScalarGridSpec(
            num_scalar_prefetch=0,
            grid=(n_tiles,),
            in_specs=[
                # Activations: pipelined TM-row tiles, true input_dim width.
                pl.BlockSpec((tm_eff, input_dim), lambda i: (i, 0)),
                # Packed parameters: one full-array block, constant index map
                # -> DMA'd once and VMEM-resident across all grid steps.
                pl.BlockSpec(blob.shape, lambda i: (0, 0)),
            ],
            out_specs=pl.BlockSpec((tm_eff, out_pad), lambda i: (i, 0)),
        ),
        compiler_params=pltpu.CompilerParams(
            dimension_semantics=("parallel",)),
        cost_estimate=pl.CostEstimate(
            flops=flops, transcendentals=0, bytes_accessed=bytes_accessed),
    )(x_in, blob)

    if batch_pad != batch or out_pad != out_dim:
        out = out[:batch, :out_dim]
    return out


def poly_learner_forward(x, blob, meta, *, tm=1024):
    """Fused PolyLearner MLP forward on TPU.

    x:    (batch, input_dim) float32
    blob: packed parameter buffer from pack_params
    meta: metadata dict from pack_params
    """
    return _forward_impl(
        x, blob,
        input_dim=meta["input_dim"], in_sect=meta["in_sect"],
        out_pad=meta["out_pad"], out_dim=meta["out_dim"], tm=tm)


def _reference(x, params):
    h1 = jnp.maximum(x @ params["w1"] + params["b1"], 0.0)
    h2 = jnp.maximum(h1 @ params["w2"] + params["b2"], 0.0)
    return h2 @ params["w3"] + params["b3"]


if __name__ == "__main__":
    # Small shapes consistent with the module: polynomial-coefficient learner
    # mapping input_dim -> max_degree * output_dim.
    batch = 8
    input_dim = 4
    output_dim = 2
    max_degree = 3
    out_dim = max_degree * output_dim

    key = jax.random.PRNGKey(0)
    k_params, k_x = jax.random.split(key)
    params = init_params(k_params, input_dim, output_dim, max_degree)  # true 124-hidden weights
    x = jax.random.normal(k_x, (batch, input_dim), dtype=jnp.float32)

    # Default f32 parameter blob (1e-5 parity with the PyTorch reference).
    blob, meta = pack_params(params, input_dim, out_dim)

    out = jax.block_until_ready(poly_learner_forward(x, blob, meta))
    ref = _reference(x, params)
    assert out.shape == (batch, out_dim)
    assert jnp.allclose(out, ref, atol=1e-5, rtol=1e-5)

    # Batched path: 300 rows -> balanced 2 x 152-row tiles (grid of 2).
    xb = jax.random.normal(jax.random.PRNGKey(1), (300, input_dim), dtype=jnp.float32)
    outb = jax.block_until_ready(poly_learner_forward(xb, blob, meta))
    refb = _reference(xb, params)
    assert outb.shape == (300, out_dim)
    assert jnp.allclose(outb, refb, atol=1e-5, rtol=1e-5)

    # Optional bf16-weight blob (v6e/v7x compute-side option); f32 accumulation,
    # so tolerance loosens by design.
    blob_bf16, meta_bf16 = pack_params(params, input_dim, out_dim,
                                       param_dtype=jnp.bfloat16)
    outh = jax.block_until_ready(poly_learner_forward(xb, blob_bf16, meta_bf16))
    assert outh.shape == (300, out_dim)
    assert jnp.allclose(outh, refb, atol=5e-2, rtol=5e-2)

    # TODO(synk): fit/predict/co (training loop, device plumbing, coefficient
    # extraction) are host-side utilities, not part of the forward kernel.

    print("KERNEL_OK")
</pallas_src>

<mosaic_0001>
module attributes {stable_mosaic.version = 11 : i64} {
  func.func @kernel(%arg0: i32, %arg1: memref<8x4xf32, #tpu.memory_space<vmem>>, %arg2: memref<320x128xf32, #tpu.memory_space<vmem>>, %arg3: memref<8x8xf32, #tpu.memory_space<vmem>>) attributes {dimension_semantics = [#tpu.dimension_semantics<parallel>], iteration_bounds = array<i64: 1>, scalar_prefetch = 0 : i64, scratch_operands = 0 : i64, tpu.core_type = #tpu.core_type<tc>, window_params = [{transform_indices = @transform_0, window_bounds = array<i64: 8, 4>}, {pipeline_mode = #tpu.pipeline_mode<synchronous>, transform_indices = @transform_1, window_bounds = array<i64: 320, 128>}, {transform_indices = @transform_2, window_bounds = array<i64: 8, 8>}]} {
    %c0 = arith.constant 0 : index
    %c0_0 = arith.constant 0 : index
    %0 = vector.load %arg1[%c0, %c0_0] : memref<8x4xf32, #tpu.memory_space<vmem>>, vector<8x4xf32>
    %c0_1 = arith.constant 0 : index
    %c0_2 = arith.constant 0 : index
    %1 = vector.load %arg2[%c0_1, %c0_2] : memref<320x128xf32, #tpu.memory_space<vmem>>, vector<4x128xf32>
    %c16 = arith.constant 16 : index
    %c0_3 = arith.constant 0 : index
    %2 = vector.load %arg2[%c16, %c0_3] : memref<320x128xf32, #tpu.memory_space<vmem>>, vector<1x128xf32>
    %c32 = arith.constant 32 : index
    %c0_4 = arith.constant 0 : index
    %3 = vector.load %arg2[%c32, %c0_4] : memref<320x128xf32, #tpu.memory_space<vmem>>, vector<128x128xf32>
    %c160 = arith.constant 160 : index
    %c0_5 = arith.constant 0 : index
    %4 = vector.load %arg2[%c160, %c0_5] : memref<320x128xf32, #tpu.memory_space<vmem>>, vector<1x128xf32>
    %c176 = arith.constant 176 : index
    %c0_6 = arith.constant 0 : index
    %5 = vector.load %arg2[%c176, %c0_6] : memref<320x128xf32, #tpu.memory_space<vmem>>, vector<128x8xf32>
    %c304 = arith.constant 304 : index
    %c0_7 = arith.constant 0 : index
    %6 = vector.load %arg2[%c304, %c0_7] : memref<320x128xf32, #tpu.memory_space<vmem>>, vector<1x8xf32>
    %cst = arith.constant dense<0.000000e+00> : vector<8x128xf32>
    %7 = tpu.matmul %0, %1, %cst {dimension_numbers = #tpu.dot_dimension_numbers<[1], [0], [0], [1], [0, 0, 1, 1], [], []>} : vector<8x4xf32>, vector<4x128xf32>, vector<8x128xf32> -> vector<8x128xf32>
    %8 = vector.broadcast %2 : vector<1x128xf32> to vector<8x128xf32>
    %9 = arith.addf %7, %8 : vector<8x128xf32>
    %cst_8 = arith.constant 0.000000e+00 : f32
    %10 = vector.broadcast %cst_8 : f32 to vector<8x128xf32>
    %11 = arith.maximumf %9, %10 : vector<8x128xf32>
    %cst_9 = arith.constant dense<0.000000e+00> : vector<8x128xf32>
    %12 = tpu.matmul %11, %3, %cst_9 {dimension_numbers = #tpu.dot_dimension_numbers<[1], [0], [0], [1], [0, 0, 1, 1], [], []>} : vector<8x128xf32>, vector<128x128xf32>, vector<8x128xf32> -> vector<8x128xf32>
    %13 = vector.broadcast %4 : vector<1x128xf32> to vector<8x128xf32>
    %14 = arith.addf %12, %13 : vector<8x128xf32>
    %cst_10 = arith.constant 0.000000e+00 : f32
    %15 = vector.broadcast %cst_10 : f32 to vector<8x128xf32>
    %16 = arith.maximumf %14, %15 : vector<8x128xf32>
    %cst_11 = arith.constant dense<0.000000e+00> : vector<8x8xf32>
    %17 = tpu.matmul %16, %5, %cst_11 {dimension_numbers = #tpu.dot_dimension_numbers<[1], [0], [0], [1], [0, 0, 1, 1], [], []>} : vector<8x128xf32>, vector<128x8xf32>, vector<8x8xf32> -> vector<8x8xf32>
    %18 = vector.broadcast %6 : vector<1x8xf32> to vector<8x8xf32>
    %19 = arith.addf %17, %18 : vector<8x8xf32>
    %c0_12 = arith.constant 0 : index
    %c0_13 = arith.constant 0 : index
    %20 = vector.load %arg3[%c0_12, %c0_13] : memref<8x8xf32, #tpu.memory_space<vmem>>, vector<8x8xf32>
    tpu.vector_store %arg3[%c0_12, %c0_13], %19 {strides = array<i32>} : memref<8x8xf32, #tpu.memory_space<vmem>>, vector<8x8xf32>,
    return
  }
  func.func @transform_0(%arg0: i32) -> (i32, i32) {
    %c0_i32 = arith.constant 0 : i32
    %c0_i32_0 = arith.constant 0 : i32
    return %arg0, %c0_i32 : i32, i32
  }
  func.func @transform_1(%arg0: i32) -> (i32, i32) {
    %c0_i32 = arith.constant 0 : i32
    %c0_i32_0 = arith.constant 0 : i32
    %c0_i32_1 = arith.constant 0 : i32
    return %c0_i32, %c0_i32_0 : i32, i32
  }
  func.func @transform_2(%arg0: i32) -> (i32, i32) {
    %c0_i32 = arith.constant 0 : i32
    %c0_i32_0 = arith.constant 0 : i32
    return %arg0, %c0_i32 : i32, i32
  }
}

</mosaic_0001>

<llo_original>
// kernel: _forward_impl.1
$region0: #{_forward_impl.1}
  #allocation0 [shape = 'u32[]', space=smem, size = 0x4, offset = 0x4, fixed_abs, tag = 'smem constant byte address 0x4 - core index']
  #allocation1 [shape = 'u32[144,128]{1,0:T(1,128)}', space=vmem, size = 0x12000, scoped, tag = 'internal scratch']
  %s0 = inlined_call_operand.vmem [shape: f32[8,4], index: 0, kind: input, shape index: {}]
  %s1 = inlined_call_operand.hbm [shape: f32[320,128], index: 1, kind: input, shape index: {}]
  %s2 = inlined_call_operand.hbm [shape: f32[8,8], index: 2, kind: output, shape index: {}]
  %s3 = sld [smem:[#allocation0]]
  $region22: #{_forward_impl.1} parent=0
    _
  %s5 = ssub.s32 1, %s3
  %s6 = scalar_select 0, %s5, %s3
  $region1: #{_forward_impl.1} parent=0
    #allocation2 [shape = 'u8[163840]{0}', space=vmem, size = 0x28000, scoped, tag = 'input window, operand 1, single buffered']
    #allocation3 [shape = 's32[1]{0}', space=sflag, size = 0x4, scoped, tag = 'scoped memory for _forward_impl.1']
    #allocation4 [shape = 's32[1]{0}', space=sflag, size = 0x4, scoped, tag = 'scoped memory for _forward_impl.1']
    #allocation5 [shape = 'u8[4096]{0}', space=vmem, size = 0x1000, scoped, tag = 'output window, operand 0, single buffered']
    %7 = vsyncpa [#allocation3], 0
    %8 = vsyncpa [#allocation4], 0
    // Predicated region
    $region2: #{_forward_impl.1} parent=1 // pred_check
      _
    $region3: #{_forward_impl.1} parent=1 // pred_check_branch
      %10 = sbr.rel (0) target = $region5
    $region4: #{_forward_impl.1} parent=1 // pred_region
      _
    $region5: #{_forward_impl.1} parent=1 // pred_fallthru
      _
    // Predicated region
    $region6: #{_forward_impl.1} parent=1 // pred_check
      _
    $region7: #{_forward_impl.1} parent=1 // pred_check_branch
      %12 = sbr.rel (0) target = $region9
    $region8: #{_forward_impl.1} parent=1 // pred_region
      %s14 = ssub.s32 5120, 5120
      %15 = vsyncadd [#allocation3], %s14
      %s16 = sshll.u32 [#allocation2], 4
      %s17 = int_to_ptr.vmem [resolvable:$true] %s16
      %22 = dma.hbm_to_vmem [thread:$0]  %s1, 5120, %s17, [#allocation3], 128, 128, 8
    $region9: #{_forward_impl.1} parent=1 // pred_fallthru
      _
    // Predicated region
    $region10: #{_forward_impl.1} parent=1 // pred_check
      _
    $region11: #{_forward_impl.1} parent=1 // pred_check_branch
      %24 = sbr.rel (0) target = $region13
    $region12: #{_forward_impl.1} parent=1 // pred_region
      %25 = dma.done [#allocation3], 5120
    $region13: #{_forward_impl.1} parent=1 // pred_fallthru
      _
    %v26 = vld [vmem:[%s0] sm:$0xff]
    %v27 = vld [vmem:[#allocation2] sm:$0xf]
    %v28 = vld [vmem:[#allocation2 + $0x10] sm:$0x1]
    %v29 = vld [vmem:[#allocation2 + $0x20] sm:$0xff]
    %v30 = vld [vmem:[#allocation2 + $0x28] sm:$0xff]
    %v31 = vld [vmem:[#allocation2 + $0x30] sm:$0xff]
    %v32 = vld [vmem:[#allocation2 + $0x38] sm:$0xff]
    %v33 = vld [vmem:[#allocation2 + $0x40] sm:$0xff]
    %v34 = vld [vmem:[#allocation2 + $0x48] sm:$0xff]
    %v35 = vld [vmem:[#allocation2 + $0x50] sm:$0xff]
    %v36 = vld [vmem:[#allocation2 + $0x58] sm:$0xff]
    %v37 = vld [vmem:[#allocation2 + $0x60] sm:$0xff]
    %v38 = vld [vmem:[#allocation2 + $0x68] sm:$0xff]
    %v39 = vld [vmem:[#allocation2 + $0x70] sm:$0xff]
    %v40 = vld [vmem:[#allocation2 + $0x78] sm:$0xff]
    %v41 = vld [vmem:[#allocation2 + $0x80] sm:$0xff]
    %v42 = vld [vmem:[#allocation2 + $0x88] sm:$0xff]
    %v43 = vld [vmem:[#allocation2 + $0x90] sm:$0xff]
    %v44 = vld [vmem:[#allocation2 + $0x98] sm:$0xff]
    %v45 = vld [vmem:[#allocation2 + $0xa0] sm:$0x1]
    %v46 = vld [vmem:[#allocation2 + $0xb0] sm:$0xff]
    %v47 = vld [vmem:[#allocation2 + $0xb8] sm:$0xff]
    %v48 = vld [vmem:[#allocation2 + $0xc0] sm:$0xff]
    %v49 = vld [vmem:[#allocation2 + $0xc8] sm:$0xff]
    %v50 = vld [vmem:[#allocation2 + $0xd0] sm:$0xff]
    %v51 = vld [vmem:[#allocation2 + $0xd8] sm:$0xff]
    %v52 = vld [vmem:[#allocation2 + $0xe0] sm:$0xff]
    %v53 = vld [vmem:[#allocation2 + $0xe8] sm:$0xff]
    %v54 = vld [vmem:[#allocation2 + $0xf0] sm:$0xff]
    %v55 = vld [vmem:[#allocation2 + $0xf8] sm:$0xff]
    %v56 = vld [vmem:[#allocation2 + $0x100] sm:$0xff]
    %v57 = vld [vmem:[#allocation2 + $0x108] sm:$0xff]
    %v58 = vld [vmem:[#allocation2 + $0x110] sm:$0xff]
    %v59 = vld [vmem:[#allocation2 + $0x118] sm:$0xff]
    %v60 = vld [vmem:[#allocation2 + $0x120] sm:$0xff]
    %v61 = vld [vmem:[#allocation2 + $0x128] sm:$0xff]
    %v62 = vld [vmem:[#allocation2 + $0x130] sm:$0x1]
    %v63 = vlaneseq
    %v64 = vshrl.u32 %v63, 7
    %v65 = vsub.s32 0, %v64
    %v66 = vrot.slane %v28, %v65
    %vm67 = vcmask 31744
    %v69 = vsel %vm67, %v26, 0
    %vm71 = vcmask 1043456
    %v73 = vsel %vm71, %v27, 0
    %75 = vmatprep.subr.mxu0 0.0
    %76 = vmatpush1.msra.mxu0 %v73
    %77 = vmatprep.subr.mxu0 0.0
    %78 = vmatpush1.msra.mxu0 0.0
    %79 = vmatprep.subr.mxu0 0.0
    %80 = vmatpush1.msra.mxu0 0.0
    %81 = vmatprep.subr.mxu0 0.0
    %82 = vmatpush1.msra.mxu0 0.0
    %83 = vmatprep.subr.mxu0 0.0
    %84 = vmatpush1.msra.mxu0 0.0
    %85 = vmatprep.subr.mxu0 0.0
    %86 = vmatpush1.msra.mxu0 0.0
    %87 = vmatprep.subr.mxu0 0.0
    %88 = vmatpush1.msra.mxu0 0.0
    %89 = vmatprep.subr.mxu0 0.0
    %90 = vmatpush1.msra.mxu0 0.0
    %91 = vmatprep.subr.mxu0 0.0
    %92 = vmatpush1.msra.mxu0 0.0
    %93 = vmatprep.subr.mxu0 0.0
    %94 = vmatpush1.msra.mxu0 0.0
    %95 = vmatprep.subr.mxu0 0.0
    %96 = vmatpush1.msra.mxu0 0.0
    %97 = vmatprep.subr.mxu0 0.0
    %98 = vmatpush1.msra.mxu0 0.0
    %99 = vmatprep.subr.mxu0 0.0
    %100 = vmatpush1.msra.mxu0 0.0
    %101 = vmatprep.subr.mxu0 0.0
    %102 = vmatpush1.msra.mxu0 0.0
    %103 = vmatprep.subr.mxu0 0.0
    %104 = vmatpush1.msra.mxu0 0.0
    %105 = vmatprep.subr.mxu0 0.0
    %106 = vmatpush1.msra.mxu0 0.0
    %107 = vmatprep.subr.mxu0 0.0
    %108 = vmatpush1.msra.mxu0 0.0
    %109 = vmatprep.subr.mxu0 0.0
    %110 = vmatpush1.msra.mxu0 0.0
    %111 = vmatprep.subr.mxu0 0.0
    %112 = vmatpush1.msra.mxu0 0.0
    %113 = vmatprep.subr.mxu0 0.0
    %114 = vmatpush1.msra.mxu0 0.0
    %115 = vmatprep.subr.mxu0 0.0
    %116 = vmatpush1.msra.mxu0 0.0
    %117 = vmatprep.subr.mxu0 0.0
    %118 = vmatpush1.msra.mxu0 0.0
    %119 = vmatprep.subr.mxu0 0.0
    %120 = vmatpush1.msra.mxu0 0.0
    %121 = vmatprep.subr.mxu0 0.0
    %122 = vmatpush1.msra.mxu0 0.0
    %123 = vmatprep.subr.mxu0 0.0
    %124 = vmatpush1.msra.mxu0 0.0
    %125 = vmatprep.subr.mxu0 0.0
    %126 = vmatpush1.msra.mxu0 0.0
    %127 = vmatprep.subr.mxu0 0.0
    %128 = vmatpush1.msra.mxu0 0.0
    %129 = vmatprep.subr.mxu0 0.0
    %130 = vmatpush1.msra.mxu0 0.0
    %131 = vmatprep.subr.mxu0 0.0
    %132 = vmatpush1.msra.mxu0 0.0
    %133 = vmatprep.subr.mxu0 0.0
    %134 = vmatpush1.msra.mxu0 0.0
    %135 = vmatprep.subr.mxu0 0.0
    %136 = vmatpush1.msra.mxu0 0.0
    %137 = vmatprep.subr.mxu0 0.0
    %138 = vmatpush1.msra.mxu0 0.0
    %139 = vmatprep.mubr.f32.mxu0 0.0
    %140 = vmatmul.mubr.f32.gmra.mrb[0].mxu0 %v69
    %v141 = vpop.f32.mrb[0].mxu0
    %v142 = vadd.f32 %v66, %v141
    %v143 = vpop.f32.mrb[0].mxu0
    %144 = vdwg.mxu0
    %v145 = vmax.f32 %v142, 0.0
    %v146 = vlaneseq
    %v147 = vshrl.u32 %v146, 7
    %v148 = vsub.s32 0, %v147
    %v149 = vrot.slane %v45, %v148
    %150 = vmatprep.subr.mxu0 0.0
    %151 = vmatpush1.msra.mxu0 %v29
    %152 = vmatprep.subr.mxu0 0.0
    %153 = vmatpush1.msra.mxu0 %v30
    %154 = vmatprep.subr.mxu0 0.0
    %155 = vmatpush1.msra.mxu0 %v31
    %156 = vmatprep.subr.mxu0 0.0
    %157 = vmatpush1.msra.mxu0 %v32
    %158 = vmatprep.subr.mxu0 0.0
    %159 = vmatpush1.msra.mxu0 %v33
    %160 = vmatprep.subr.mxu0 0.0
    %161 = vmatpush1.msra.mxu0 %v34
    %162 = vmatprep.subr.mxu0 0.0
    %163 = vmatpush1.msra.mxu0 %v35
    %164 = vmatprep.subr.mxu0 0.0
    %165 = vmatpush1.msra.mxu0 %v36
    %166 = vmatprep.subr.mxu0 0.0
    %167 = vmatpush1.msra.mxu0 %v37
    %168 = vmatprep.subr.mxu0 0.0
    %169 = vmatpush1.msra.mxu0 %v38
    %170 = vmatprep.subr.mxu0 0.0
    %171 = vmatpush1.msra.mxu0 %v39
    %172 = vmatprep.subr.mxu0 0.0
    %173 = vmatpush1.msra.mxu0 %v40
    %174 = vmatprep.subr.mxu0 0.0
    %175 = vmatpush1.msra.mxu0 %v41
    %176 = vmatprep.subr.mxu0 0.0
    %177 = vmatpush1.msra.mxu0 %v42
    %178 = vmatprep.subr.mxu0 0.0
    %179 = vmatpush1.msra.mxu0 %v43
    %180 = vmatprep.subr.mxu0 0.0
    %181 = vmatpush1.msra.mxu0 %v44
    %182 = vmatprep.subr.mxu0 0.0
    %183 = vmatpush1.msra.mxu0 0.0
    %184 = vmatprep.subr.mxu0 0.0
    %185 = vmatpush1.msra.mxu0 0.0
    %186 = vmatprep.subr.mxu0 0.0
    %187 = vmatpush1.msra.mxu0 0.0
    %188 = vmatprep.subr.mxu0 0.0
    %189 = vmatpush1.msra.mxu0 0.0
    %190 = vmatprep.subr.mxu0 0.0
    %191 = vmatpush1.msra.mxu0 0.0
    %192 = vmatprep.subr.mxu0 0.0
    %193 = vmatpush1.msra.mxu0 0.0
    %194 = vmatprep.subr.mxu0 0.0
    %195 = vmatpush1.msra.mxu0 0.0
    %196 = vmatprep.subr.mxu0 0.0
    %197 = vmatpush1.msra.mxu0 0.0
    %198 = vmatprep.subr.mxu0 0.0
    %199 = vmatpush1.msra.mxu0 0.0
    %200 = vmatprep.subr.mxu0 0.0
    %201 = vmatpush1.msra.mxu0 0.0
    %202 = vmatprep.subr.mxu0 0.0
    %203 = vmatpush1.msra.mxu0 0.0
    %204 = vmatprep.subr.mxu0 0.0
    %205 = vmatpush1.msra.mxu0 0.0
    %206 = vmatprep.subr.mxu0 0.0
    %207 = vmatpush1.msra.mxu0 0.0
    %208 = vmatprep.subr.mxu0 0.0
    %209 = vmatpush1.msra.mxu0 0.0
    %210 = vmatprep.subr.mxu0 0.0
    %211 = vmatpush1.msra.mxu0 0.0
    %212 = vmatprep.subr.mxu0 0.0
    %213 = vmatpush1.msra.mxu0 0.0
    %214 = vmatprep.mubr.f32.mxu0 0.0
    %215 = vmatmul.mubr.f32.gmra.mrb[0].mxu0 %v145
    %v216 = vpop.f32.mrb[0].mxu0
    %v217 = vadd.f32 %v149, %v216
    %v218 = vpop.f32.mrb[0].mxu0
    %219 = vdwg.mxu0
    %v220 = vmax.f32 %v217, 0.0
    %v221 = vlaneseq
    %v222 = vshrl.u32 %v221, 7
    %v223 = vsub.s32 0, %v222
    %v224 = vrot.slane %v62, %v223
    %225 = vmatprep.subr.mxu0 0.0
    %226 = vmatpush1.msra.mxu0 %v46
    %227 = vmatprep.subr.mxu0 0.0
    %228 = vmatpush1.msra.mxu0 %v47
    %229 = vmatprep.subr.mxu0 0.0
    %230 = vmatpush1.msra.mxu0 %v48
    %231 = vmatprep.subr.mxu0 0.0
    %232 = vmatpush1.msra.mxu0 %v49
    %233 = vmatprep.subr.mxu0 0.0
    %234 = vmatpush1.msra.mxu0 %v50
    %235 = vmatprep.subr.mxu0 0.0
    %236 = vmatpush1.msra.mxu0 %v51
    %237 = vmatprep.subr.mxu0 0.0
    %238 = vmatpush1.msra.mxu0 %v52
    %239 = vmatprep.subr.mxu0 0.0
    %240 = vmatpush1.msra.mxu0 %v53
    %241 = vmatprep.subr.mxu0 0.0
    %242 = vmatpush1.msra.mxu0 %v54
    %243 = vmatprep.subr.mxu0 0.0
    %244 = vmatpush1.msra.mxu0 %v55
    %245 = vmatprep.subr.mxu0 0.0
    %246 = vmatpush1.msra.mxu0 %v56
    %247 = vmatprep.subr.mxu0 0.0
    %248 = vmatpush1.msra.mxu0 %v57
    %249 = vmatprep.subr.mxu0 0.0
    %250 = vmatpush1.msra.mxu0 %v58
    %251 = vmatprep.subr.mxu0 0.0
    %252 = vmatpush1.msra.mxu0 %v59
    %253 = vmatprep.subr.mxu0 0.0
    %254 = vmatpush1.msra.mxu0 %v60
    %255 = vmatprep.subr.mxu0 0.0
    %256 = vmatpush1.msra.mxu0 %v61
    %257 = vmatprep.subr.mxu0 0.0
    %258 = vmatpush1.msra.mxu0 0.0
    %259 = vmatprep.subr.mxu0 0.0
    %260 = vmatpush1.msra.mxu0 0.0
    %261 = vmatprep.subr.mxu0 0.0
    %262 = vmatpush1.msra.mxu0 0.0
    %263 = vmatprep.subr.mxu0 0.0
    %264 = vmatpush1.msra.mxu0 0.0
    %265 = vmatprep.subr.mxu0 0.0
    %266 = vmatpush1.msra.mxu0 0.0
    %267 = vmatprep.subr.mxu0 0.0
    %268 = vmatpush1.msra.mxu0 0.0
    %269 = vmatprep.subr.mxu0 0.0
    %270 = vmatpush1.msra.mxu0 0.0
    %271 = vmatprep.subr.mxu0 0.0
    %272 = vmatpush1.msra.mxu0 0.0
    %273 = vmatprep.subr.mxu0 0.0
    %274 = vmatpush1.msra.mxu0 0.0
    %275 = vmatprep.subr.mxu0 0.0
    %276 = vmatpush1.msra.mxu0 0.0
    %277 = vmatprep.subr.mxu0 0.0
    %278 = vmatpush1.msra.mxu0 0.0
    %279 = vmatprep.subr.mxu0 0.0
    %280 = vmatpush1.msra.mxu0 0.0
    %281 = vmatprep.subr.mxu0 0.0
    %282 = vmatpush1.msra.mxu0 0.0
    %283 = vmatprep.subr.mxu0 0.0
    %284 = vmatpush1.msra.mxu0 0.0
    %285 = vmatprep.subr.mxu0 0.0
    %286 = vmatpush1.msra.mxu0 0.0
    %287 = vmatprep.subr.mxu0 0.0
    %288 = vmatpush1.msra.mxu0 0.0
    %289 = vmatprep.mubr.f32.mxu0 0.0
    %290 = vmatmul.mubr.f32.gmra.mrb[0].mxu0 %v220
    %v291 = vpop.f32.mrb[0].mxu0
    %v292 = vadd.f32 %v224, %v291
    %v293 = vpop.f32.mrb[0].mxu0
    %294 = vdwg.mxu0
    %vm295 = vcmask 64512
    %296 = vst.msk [vmem:[#allocation5] sm:$0xff] %vm295, %v292
    // Predicated region
    $region14: #{_forward_impl.1} parent=1 // pred_check
      _
    $region15: #{_forward_impl.1} parent=1 // pred_check_branch
      %298 = sbr.rel (0) target = $region17
    $region16: #{_forward_impl.1} parent=1 // pred_region
      %s300 = ssub.s32 128, 128
      %301 = vsyncadd [#allocation4], %s300
      %s303 = sshll.u32 [#allocation5], 4
      %s304 = int_to_ptr.vmem [resolvable:$true] %s303
      %306 = dma.vmem_to_hbm [thread:$0]  %s304, 128, %s2, [#allocation4]
    $region17: #{_forward_impl.1} parent=1 // pred_fallthru
      _
    // Predicated region
    $region18: #{_forward_impl.1} parent=1 // pred_check
      _
    $region19: #{_forward_impl.1} parent=1 // pred_check_branch
      %308 = sbr.rel (0) target = $region21
    $region20: #{_forward_impl.1} parent=1 // pred_region
      %309 = dma.done [#allocation4], 128
    $region21: #{_forward_impl.1} parent=1 // pred_fallthru
      _
    %310 = vsyncpa [#allocation3], 1
    %311 = vsyncpa [#allocation4], 1

</llo_original>
